<compile_context>
chip_gen: v7x
topology: tpu7x:2x2x1
jax: 0.10.0
libtpu: 0.0.40
codegen_flags: <defaults>
</compile_context>

<pallas_src>
import functools

import jax
import jax.numpy as jnp
from jax.experimental import pallas as pl
from jax.experimental.pallas import tpu as pltpu


def _round_up(x, m):
    return ((x + m - 1) // m) * m


# ----------------------------------------------------------------------------
# Kernel
# ----------------------------------------------------------------------------
def _snf_forward_kernel(z_ref,        # (TB, P) f32   [xs | c | 0-pad]
                        noise_ref,    # (TB, P) f32   N(0,1) in cols < Dx, else 0
                        w_ref,        # (P, 5P) mm_dtype packed weights
                        b_ref,        # (8, P)  f32   biases + masks
                        out_ref,      # (TB, P) f32   xs_new (cols < Dx), logdet (col P-1)
                        *, P, nl_fwd, k_logdet, mm_dtype):
    # Cast immediately; do not keep the f32 copy of z live across the body.
    z_mm = z_ref[...].astype(mm_dtype)

    b1f = b_ref[0:1, :]
    b2f = b_ref[1:2, :]
    b1b = b_ref[2:3, :]
    b2b = b_ref[3:4, :]
    x_mask = b_ref[4:5, :]            # 1.0 for col < Dx else 0.0
    ld_sel = b_ref[5:6, :]            # 1.0 at col P-1 else 0.0

    # ---- fused layer-1: [h_f_pre | h_bc_pre] = z @ [w1f | w1bc] (N = 2P) ----
    l1 = jnp.dot(z_mm, w_ref[:, 0:2 * P], preferred_element_type=jnp.float32)
    h_f = jnp.tanh(l1[:, 0:P] + b1f)
    h_bc = l1[:, P:2 * P]             # c-contribution to backward layer 1

    # ---- forward_model output + noise ---------------------------------------
    xs_fwd = jnp.dot(h_f.astype(mm_dtype), w_ref[:, 2 * P:3 * P],
                     preferred_element_type=jnp.float32) + b2f
    xs_new = xs_fwd + nl_fwd * noise_ref[...]     # padding cols stay exactly 0

    # ---- backward_model(cat(xs_new, c)) --------------------------------------
    h_b = jnp.tanh(
        jnp.dot(xs_new.astype(mm_dtype), w_ref[:, 3 * P:4 * P],
                preferred_element_type=jnp.float32) + h_bc + b1b)
    xs_bwd = jnp.dot(h_b.astype(mm_dtype), w_ref[:, 4 * P:5 * P],
                     preferred_element_type=jnp.float32) + b2b

    # ---- logdet = -0.5 * sum(((xs_bwd - xs) / nl_b)^2) (division folded) ------
    diff = xs_bwd - z_ref[...]                    # reload z (short live range)
    sq = diff * diff * x_mask                     # mask out c / padding columns
    logdet = k_logdet * jnp.sum(sq, axis=1, keepdims=True)   # (TB, 1)

    # Fold logdet into padding column P-1 of the lane-dense output tile.
    out_ref[...] = xs_new + logdet * ld_sel


# ----------------------------------------------------------------------------
# Host-side parameter packing (done once, outside the hot path)
# ----------------------------------------------------------------------------
def pack_params(params, Dx, Dc, H, matmul_dtype=jnp.bfloat16):
    """Pack the 10 parameter tensors into one weight slab + one bias/mask slab."""
    P = _round_up(max(Dx + Dc, H, Dx, 1), 128)

    def pad_block(a, row_off=0):
        a = jnp.asarray(a, jnp.float32)
        return jnp.pad(a, ((row_off, P - row_off - a.shape[0]),
                           (0, P - a.shape[1])))

    w1f = pad_block(jnp.concatenate([params["w1f_x"], params["w1f_c"]], axis=0))
    w1bc = pad_block(params["w1b_c"], row_off=Dx)   # only the c rows of z feed h_b
    w2f = pad_block(params["w2f"])
    w1bx = pad_block(params["w1b_x"])
    w2b = pad_block(params["w2b"])
    # Lane-wise layout: [w1f | w1bc | w2f | w1bx | w2b]; the first two share
    # LHS z and are consumed by one fused N=2P matmul.
    wts = jnp.concatenate([w1f, w1bc, w2f, w1bx, w2b], axis=1).astype(matmul_dtype)

    def pad_row(b):
        b = jnp.asarray(b, jnp.float32).reshape(1, -1)
        return jnp.pad(b, ((0, 0), (0, P - b.shape[1])))

    col = jnp.arange(P)
    x_mask = (col < Dx).astype(jnp.float32).reshape(1, P)
    ld_sel = (col == P - 1).astype(jnp.float32).reshape(1, P)
    aux = jnp.concatenate(
        [pad_row(params["b1f"]), pad_row(params["b2f"]),
         pad_row(params["b1b"]), pad_row(params["b2b"]),
         x_mask, ld_sel, jnp.zeros((2, P), jnp.float32)], axis=0)
    return wts, aux, P


# ----------------------------------------------------------------------------
# Tiling choice (perf review: big tiles, but keep G >= 2 for v7x megacore)
# ----------------------------------------------------------------------------
def _pick_tile(B, block_b):
    Bp8 = _round_up(B, 8)
    TB = min(Bp8, _round_up(block_b, 8))
    if Bp8 <= TB and Bp8 > 8:
        # Whole batch would be one grid step: split so the "parallel" axis has
        # >= 2 steps (v7x TensorCore sharding); no cost on v5e/v6e.
        TB = _round_up((Bp8 + 1) // 2, 8)
    Bp = _round_up(B, TB)
    return TB, Bp, Bp // TB


# ----------------------------------------------------------------------------
# Forward wrapper
# ----------------------------------------------------------------------------
def learned_stochastic_layer_forward(xs, c, noise, packed_wts, packed_aux, P,
                                     noise_level_fwd=0.01, noise_level_bwd=None,
                                     matmul_dtype=jnp.bfloat16, block_b=1024):
    # The original module ties the forward/backward noise levels; kept as
    # separate (defaulted-equal) arguments here.
    if noise_level_bwd is None:
        noise_level_bwd = noise_level_fwd

    B, Dx = xs.shape
    Dc = c.shape[1]
    assert Dx + Dc <= P
    assert Dx < P          # spare padding lane needed for the folded logdet column

    TB, Bp, G = _pick_tile(B, block_b)

    # Lane-dense activation slab [xs | c | 0-pad] and zero-padded noise slab.
    z = jnp.concatenate([xs.astype(jnp.float32), c.astype(jnp.float32)], axis=1)
    z = jnp.pad(z, ((0, Bp - B), (0, P - (Dx + Dc))))
    noise_p = jnp.pad(noise.astype(jnp.float32), ((0, Bp - B), (0, P - Dx)))

    kernel = functools.partial(
        _snf_forward_kernel,
        P=P,
        nl_fwd=float(noise_level_fwd),
        k_logdet=float(-0.5 / (noise_level_bwd ** 2)),
        mm_dtype=matmul_dtype)

    out = pl.pallas_call(
        kernel,
        out_shape=jax.ShapeDtypeStruct((Bp, P), jnp.float32),
        grid=(G,),
        in_specs=[
            pl.BlockSpec((TB, P), lambda i: (i, 0)),        # z tile
            pl.BlockSpec((TB, P), lambda i: (i, 0)),        # noise tile
            pl.BlockSpec((P, 5 * P), lambda i: (0, 0)),     # weights (resident)
            pl.BlockSpec((8, P), lambda i: (0, 0)),         # biases/masks (resident)
        ],
        out_specs=pl.BlockSpec((TB, P), lambda i: (i, 0)),  # lane-dense output
        compiler_params=pltpu.CompilerParams(
            dimension_semantics=("parallel",)),
    )(z, noise_p, packed_wts, packed_aux)

    xs_new = out[:B, :Dx]
    logdet = out[:B, P - 1]
    return xs_new, logdet


# ----------------------------------------------------------------------------
# Pure-JAX reference (f32, highest precision) for verification
# ----------------------------------------------------------------------------
def _ref_forward(xs, c, params, noise, nl_f, nl_b):
    hp = jax.lax.Precision.HIGHEST
    z = jnp.concatenate([xs, c], axis=1)
    w1f = jnp.concatenate([params["w1f_x"], params["w1f_c"]], axis=0)
    h = jnp.tanh(jnp.dot(z, w1f, precision=hp) + params["b1f"])
    xs_fwd = jnp.dot(h, params["w2f"], precision=hp) + params["b2f"]
    xs_new = xs_fwd + nl_f * noise
    zb = jnp.concatenate([xs_new, c], axis=1)
    w1b = jnp.concatenate([params["w1b_x"], params["w1b_c"]], axis=0)
    hb = jnp.tanh(jnp.dot(zb, w1b, precision=hp) + params["b1b"])
    xs_bwd = jnp.dot(hb, params["w2b"], precision=hp) + params["b2b"]
    bwd_noise = (xs_bwd - xs) / nl_b
    logdet = -0.5 * jnp.sum(bwd_noise ** 2, axis=1)
    return xs_new, logdet


# ----------------------------------------------------------------------------
if __name__ == "__main__":
    B, Dx, Dc, H = 13, 32, 32, 64      # small, non-aligned batch exercises padding
    noise_level = 0.01

    key = jax.random.PRNGKey(0)
    keys = jax.random.split(key, 13)
    scale = 0.1
    params = {
        "w1f_x": scale * jax.random.normal(keys[0], (Dx, H), jnp.float32),
        "w1f_c": scale * jax.random.normal(keys[1], (Dc, H), jnp.float32),
        "b1f":   scale * jax.random.normal(keys[2], (1, H), jnp.float32),
        "w2f":   scale * jax.random.normal(keys[3], (H, Dx), jnp.float32),
        "b2f":   scale * jax.random.normal(keys[4], (1, Dx), jnp.float32),
        "w1b_x": scale * jax.random.normal(keys[5], (Dx, H), jnp.float32),
        "w1b_c": scale * jax.random.normal(keys[6], (Dc, H), jnp.float32),
        "b1b":   scale * jax.random.normal(keys[7], (1, H), jnp.float32),
        "w2b":   scale * jax.random.normal(keys[8], (H, Dx), jnp.float32),
        "b2b":   scale * jax.random.normal(keys[9], (1, Dx), jnp.float32),
    }
    xs = jax.random.normal(keys[10], (B, Dx), jnp.float32)
    c = jax.random.normal(keys[11], (B, Dc), jnp.float32)
    # TODO(synk): torch.randn_like is drawn on the host (jax.random.normal) and
    # streamed in; the in-kernel hardware PRNG path does not lower in the
    # harness's CPU/interpret fallback.
    noise = jax.random.normal(keys[12], (B, Dx), jnp.float32)

    xs_new_ref, logdet_ref = _ref_forward(xs, c, params, noise,
                                          noise_level, noise_level)

    # f32 matmuls (tight check) and bf16 matmuls (v6e/v7x fast path, looser).
    configs = [
        (jnp.float32, 1e-2, 1e-2, 5e-2),
        (jnp.bfloat16, 3e-2, 3e-2, 1.5e-1),
    ]
    for mm_dtype, xs_atol, xs_rtol, ld_rtol in configs:
        wts, aux, P = pack_params(params, Dx, Dc, H, matmul_dtype=mm_dtype)
        xs_new, logdet = learned_stochastic_layer_forward(
            xs, c, noise, wts, aux, P,
            noise_level_fwd=noise_level, matmul_dtype=mm_dtype)
        jax.block_until_ready((xs_new, logdet))

        assert xs_new.shape == (B, Dx) and logdet.shape == (B,)
        assert bool(jnp.all(jnp.isfinite(xs_new)))
        assert bool(jnp.all(jnp.isfinite(logdet)))
        assert bool(jnp.allclose(xs_new, xs_new_ref,
                                 atol=xs_atol, rtol=xs_rtol)), str(mm_dtype)
        assert bool(jnp.allclose(logdet, logdet_ref, rtol=ld_rtol)), str(mm_dtype)

    print("KERNEL_OK")
</pallas_src>

<mosaic_0001>
module attributes {stable_mosaic.version = 11 : i64} {
  func.func @_snf_forward_kernel(%arg0: i32, %arg1: memref<8x128xf32, #tpu.memory_space<vmem>>, %arg2: memref<8x128xf32, #tpu.memory_space<vmem>>, %arg3: memref<128x640xf32, #tpu.memory_space<vmem>>, %arg4: memref<8x128xf32, #tpu.memory_space<vmem>>, %arg5: memref<8x128xf32, #tpu.memory_space<vmem>>) attributes {dimension_semantics = [#tpu.dimension_semantics<parallel>], iteration_bounds = array<i64: 2>, scalar_prefetch = 0 : i64, scratch_operands = 0 : i64, tpu.core_type = #tpu.core_type<tc>, window_params = [{transform_indices = @transform_0, window_bounds = array<i64: 8, 128>}, {transform_indices = @transform_1, window_bounds = array<i64: 8, 128>}, {pipeline_mode = #tpu.pipeline_mode<synchronous>, transform_indices = @transform_2, window_bounds = array<i64: 128, 640>}, {pipeline_mode = #tpu.pipeline_mode<synchronous>, transform_indices = @transform_3, window_bounds = array<i64: 8, 128>}, {transform_indices = @transform_4, window_bounds = array<i64: 8, 128>}]} {
    %c0 = arith.constant 0 : index
    %c0_0 = arith.constant 0 : index
    %0 = vector.load %arg1[%c0, %c0_0] : memref<8x128xf32, #tpu.memory_space<vmem>>, vector<8x128xf32>
    %c0_1 = arith.constant 0 : index
    %c0_2 = arith.constant 0 : index
    %1 = vector.load %arg4[%c0_1, %c0_2] : memref<8x128xf32, #tpu.memory_space<vmem>>, vector<1x128xf32>
    %c1 = arith.constant 1 : index
    %c0_3 = arith.constant 0 : index
    %2 = vector.load %arg4[%c1, %c0_3] : memref<8x128xf32, #tpu.memory_space<vmem>>, vector<1x128xf32>
    %c2 = arith.constant 2 : index
    %c0_4 = arith.constant 0 : index
    %3 = vector.load %arg4[%c2, %c0_4] : memref<8x128xf32, #tpu.memory_space<vmem>>, vector<1x128xf32>
    %c3 = arith.constant 3 : index
    %c0_5 = arith.constant 0 : index
    %4 = vector.load %arg4[%c3, %c0_5] : memref<8x128xf32, #tpu.memory_space<vmem>>, vector<1x128xf32>
    %c4 = arith.constant 4 : index
    %c0_6 = arith.constant 0 : index
    %5 = vector.load %arg4[%c4, %c0_6] : memref<8x128xf32, #tpu.memory_space<vmem>>, vector<1x128xf32>
    %c5 = arith.constant 5 : index
    %c0_7 = arith.constant 0 : index
    %6 = vector.load %arg4[%c5, %c0_7] : memref<8x128xf32, #tpu.memory_space<vmem>>, vector<1x128xf32>
    %c0_8 = arith.constant 0 : index
    %c0_9 = arith.constant 0 : index
    %7 = vector.load %arg3[%c0_8, %c0_9] : memref<128x640xf32, #tpu.memory_space<vmem>>, vector<128x256xf32>
    %cst = arith.constant dense<0.000000e+00> : vector<8x256xf32>
    %8 = tpu.matmul %0, %7, %cst {dimension_numbers = #tpu.dot_dimension_numbers<[1], [0], [0], [1], [0, 0, 1, 1], [], []>} : vector<8x128xf32>, vector<128x256xf32>, vector<8x256xf32> -> vector<8x256xf32>
    %9 = vector.extract_strided_slice %8 {offsets = [0, 0], sizes = [8, 128], strides = [1, 1]} : vector<8x256xf32> to vector<8x128xf32>
    %10 = vector.broadcast %1 : vector<1x128xf32> to vector<8x128xf32>
    %11 = arith.addf %9, %10 : vector<8x128xf32>
    %12 = math.tanh %11 : vector<8x128xf32>
    %13 = vector.extract_strided_slice %8 {offsets = [0, 128], sizes = [8, 128], strides = [1, 1]} : vector<8x256xf32> to vector<8x128xf32>
    %c0_10 = arith.constant 0 : index
    %c256 = arith.constant 256 : index
    %14 = vector.load %arg3[%c0_10, %c256] : memref<128x640xf32, #tpu.memory_space<vmem>>, vector<128x128xf32>
    %cst_11 = arith.constant dense<0.000000e+00> : vector<8x128xf32>
    %15 = tpu.matmul %12, %14, %cst_11 {dimension_numbers = #tpu.dot_dimension_numbers<[1], [0], [0], [1], [0, 0, 1, 1], [], []>} : vector<8x128xf32>, vector<128x128xf32>, vector<8x128xf32> -> vector<8x128xf32>
    %16 = vector.broadcast %2 : vector<1x128xf32> to vector<8x128xf32>
    %17 = arith.addf %15, %16 : vector<8x128xf32>
    %c0_12 = arith.constant 0 : index
    %c0_13 = arith.constant 0 : index
    %18 = vector.load %arg2[%c0_12, %c0_13] : memref<8x128xf32, #tpu.memory_space<vmem>>, vector<8x128xf32>
    %cst_14 = arith.constant 0.00999999977 : f32
    %19 = vector.broadcast %cst_14 : f32 to vector<8x128xf32>
    %20 = arith.mulf %19, %18 : vector<8x128xf32>
    %21 = arith.addf %17, %20 : vector<8x128xf32>
    %c0_15 = arith.constant 0 : index
    %c384 = arith.constant 384 : index
    %22 = vector.load %arg3[%c0_15, %c384] : memref<128x640xf32, #tpu.memory_space<vmem>>, vector<128x128xf32>
    %cst_16 = arith.constant dense<0.000000e+00> : vector<8x128xf32>
    %23 = tpu.matmul %21, %22, %cst_16 {dimension_numbers = #tpu.dot_dimension_numbers<[1], [0], [0], [1], [0, 0, 1, 1], [], []>} : vector<8x128xf32>, vector<128x128xf32>, vector<8x128xf32> -> vector<8x128xf32>
    %24 = arith.addf %23, %13 : vector<8x128xf32>
    %25 = vector.broadcast %3 : vector<1x128xf32> to vector<8x128xf32>
    %26 = arith.addf %24, %25 : vector<8x128xf32>
    %27 = math.tanh %26 : vector<8x128xf32>
    %c0_17 = arith.constant 0 : index
    %c512 = arith.constant 512 : index
    %28 = vector.load %arg3[%c0_17, %c512] : memref<128x640xf32, #tpu.memory_space<vmem>>, vector<128x128xf32>
    %cst_18 = arith.constant dense<0.000000e+00> : vector<8x128xf32>
    %29 = tpu.matmul %27, %28, %cst_18 {dimension_numbers = #tpu.dot_dimension_numbers<[1], [0], [0], [1], [0, 0, 1, 1], [], []>} : vector<8x128xf32>, vector<128x128xf32>, vector<8x128xf32> -> vector<8x128xf32>
    %30 = vector.broadcast %4 : vector<1x128xf32> to vector<8x128xf32>
    %31 = arith.addf %29, %30 : vector<8x128xf32>
    %c0_19 = arith.constant 0 : index
    %c0_20 = arith.constant 0 : index
    %32 = vector.load %arg1[%c0_19, %c0_20] : memref<8x128xf32, #tpu.memory_space<vmem>>, vector<8x128xf32>
    %33 = arith.subf %31, %32 : vector<8x128xf32>
    %34 = arith.mulf %33, %33 : vector<8x128xf32>
    %35 = vector.broadcast %5 : vector<1x128xf32> to vector<8x128xf32>
    %36 = arith.mulf %34, %35 : vector<8x128xf32>
    %cst_21 = arith.constant dense<0.000000e+00> : vector<8xf32>
    %37 = vector.multi_reduction <add>, %36, %cst_21 [1] : vector<8x128xf32> to vector<8xf32>
    %38 = vector.shape_cast %37 : vector<8xf32> to vector<8x1xf32>
    %cst_22 = arith.constant -5.000000e+03 : f32
    %39 = vector.broadcast %cst_22 : f32 to vector<8x1xf32>
    %40 = arith.mulf %39, %38 : vector<8x1xf32>
    %41 = vector.broadcast %40 : vector<8x1xf32> to vector<8x128xf32>
    %42 = vector.broadcast %6 : vector<1x128xf32> to vector<8x128xf32>
    %43 = arith.mulf %41, %42 : vector<8x128xf32>
    %44 = arith.addf %21, %43 : vector<8x128xf32>
    %c0_23 = arith.constant 0 : index
    %c0_24 = arith.constant 0 : index
    %45 = vector.load %arg5[%c0_23, %c0_24] : memref<8x128xf32, #tpu.memory_space<vmem>>, vector<8x128xf32>
    tpu.vector_store %arg5[%c0_23, %c0_24], %44 {strides = array<i32>} : memref<8x128xf32, #tpu.memory_space<vmem>>, vector<8x128xf32>,
    return
  }
  func.func @transform_0(%arg0: i32) -> (i32, i32) {
    %c0_i32 = arith.constant 0 : i32
    %c0_i32_0 = arith.constant 0 : i32
    return %arg0, %c0_i32 : i32, i32
  }
  func.func @transform_1(%arg0: i32) -> (i32, i32) {
    %c0_i32 = arith.constant 0 : i32
    %c0_i32_0 = arith.constant 0 : i32
    return %arg0, %c0_i32 : i32, i32
  }
  func.func @transform_2(%arg0: i32) -> (i32, i32) {
    %c0_i32 = arith.constant 0 : i32
    %c0_i32_0 = arith.constant 0 : i32
    %c0_i32_1 = arith.constant 0 : i32
    return %c0_i32, %c0_i32_0 : i32, i32
  }
  func.func @transform_3(%arg0: i32) -> (i32, i32) {
    %c0_i32 = arith.constant 0 : i32
    %c0_i32_0 = arith.constant 0 : i32
    %c0_i32_1 = arith.constant 0 : i32
    return %c0_i32, %c0_i32_0 : i32, i32
  }
  func.func @transform_4(%arg0: i32) -> (i32, i32) {
    %c0_i32 = arith.constant 0 : i32
    %c0_i32_0 = arith.constant 0 : i32
    return %arg0, %c0_i32 : i32, i32
  }
}

</mosaic_0001>

<llo_original>
// kernel: tpu_custom_call.1
$region0: #{tpu_custom_call.1}
  #allocation0 [shape = 'u32[]', space=smem, size = 0x4, offset = 0x4, fixed_abs, tag = 'smem constant byte address 0x4 - core index']
  #allocation1 [shape = 'u32[144,128]{1,0:T(1,128)}', space=vmem, size = 0x12000, scoped, tag = 'internal scratch']
  %s0 = inlined_call_operand.hbm [shape: f32[16,128], index: 0, kind: input, shape index: {}]
  %s1 = inlined_call_operand.hbm [shape: f32[16,128], index: 1, kind: input, shape index: {}]
  %s2 = inlined_call_operand.hbm [shape: f32[128,640], index: 2, kind: input, shape index: {}]
  %s3 = inlined_call_operand.vmem [shape: f32[8,128], index: 3, kind: input, shape index: {}]
  %s4 = inlined_call_operand.hbm [shape: f32[16,128], index: 4, kind: output, shape index: {}]
  %s5 = sld [smem:[#allocation0]]
  $region61: #{tpu_custom_call.1} parent=0
    _
  %s7 = ssub.s32 1, %s5
  %s8 = scalar_select 0, %s7, %s5
  $region1: #{tpu_custom_call.1} parent=0
    #allocation2 [shape = 'u8[8192]{0}', space=vmem, size = 0x2000, scoped, tag = 'input window, operand 0']
    #allocation3 [shape = 's32[2]{0}', space=sflag, size = 0x8, scoped, tag = 'scoped memory for tpu_custom_call.1']
    #allocation4 [shape = 's32[2]{0}', space=sflag, size = 0x8, scoped, tag = 'scoped memory for tpu_custom_call.1']
    #allocation5 [shape = 'u8[8192]{0}', space=vmem, size = 0x2000, scoped, tag = 'input window, operand 1']
    #allocation6 [shape = 's32[2]{0}', space=sflag, size = 0x8, scoped, tag = 'scoped memory for tpu_custom_call.1']
    #allocation7 [shape = 'u8[327680]{0}', space=vmem, size = 0x50000, scoped, tag = 'input window, operand 2, single buffered']
    #allocation8 [shape = 'u8[8192]{0}', space=vmem, size = 0x2000, scoped, tag = 'output window, operand 0']
    %9 = vsyncpa [#allocation3], 0
    %s10 = scalar_lea.sflag [#allocation3], 1
    %11 = vsyncpa %s10, 0
    %12 = vsyncpa [#allocation6], 0
    %s13 = scalar_lea.sflag [#allocation6], 1
    %14 = vsyncpa %s13, 0
    %15 = vsyncpa [#allocation4], 0
    %s16 = scalar_lea.sflag [#allocation4], 1
    %17 = vsyncpa %s16, 0
    loop: start=0, step=1, limit=4
    $region2: #{tpu_custom_call.1} parent=1 // loop_pre_header
      _
    $region3: #{tpu_custom_call.1} parent=1 // loop_header
      %s19 = sphi 0, %s23
      %p20 = scmp.ge.s32.totalorder %s19, 4
      %s29 = sphi 0, %s31
      %s32 = sphi 0, %s29
      %s33 = sphi 0, %s32
      %s49 = sphi 0, %s33
      %s55 = sphi 0, %s57
      %s58 = sphi 0, %s55
      %s59 = sphi 0, %s58
      %s75 = sphi 0, %s59
      %s79 = sphi 0, %s79
      %s81 = sphi 0, %s79
      %s82 = sphi 0, %s81
      %s96 = sphi 0, %s82
      %s100 = sphi 0, %s100
      %s102 = sphi 0, %s100
      %s103 = sphi 0, %s102
      %s117 = sphi 0, %s103
      %s123 = sphi 0, %s125
      %s126 = sphi 0, %s123
      %s127 = sphi 0, %s126
      %s143 = sphi 0, %s127
    $region4: #{tpu_custom_call.1} parent=1 // loop_header_branch
      %22 = sbr.rel (%p20) target = $region8
    $region5: #{tpu_custom_call.1} parent=1 // loop_body
      %s24 = ssub.s32 %s19, 1
      %s25 = ssub.s32 %s19, 2
      %s26 = sadd.s32 %s19, 1
      %s27 = ssub.s32 %s19, %s26
      %p28 = scmp.eq.s32.totalorder %s27, 0
      %s30 = sadd.s32 %s29, 1
      %s31 = scalar_select %p28, %s29, %s30
      %p34 = pneg %p28
      %p35 = scmp.eq.s32.totalorder %s19, 1
      %p36 = por %p34, %p35
      %p37 = scmp.ne.s32.totalorder %s29, %s32
      %p38 = scmp.eq.s32.totalorder %s19, 0
      %p39 = por %p37, %p38
      %p40 = scmp.ne.s32.totalorder %s29, %s32
      %p41 = scmp.eq.s32.totalorder %s24, 1
      %p42 = por %p40, %p41
      %p43 = scmp.ne.s32.totalorder %s32, %s33
      %p44 = scmp.eq.s32.totalorder %s24, 0
      %p45 = por %p43, %p44
      %p46 = scmp.ne.s32.totalorder %s32, %s33
      %p47 = scmp.eq.s32.totalorder %s25, 1
      %p48 = por %p46, %p47
      %p50 = scmp.ne.s32.totalorder %s33, %s49
      %p51 = scmp.eq.s32.totalorder %s25, 0
      %p52 = por %p50, %p51
      %s53 = ssub.s32 %s19, %s26
      %p54 = scmp.eq.s32.totalorder %s53, 0
      %s56 = sadd.s32 %s55, 1
      %s57 = scalar_select %p54, %s55, %s56
      %p60 = pneg %p54
      %p61 = scmp.eq.s32.totalorder %s19, 1
      %p62 = por %p60, %p61
      %p63 = scmp.ne.s32.totalorder %s55, %s58
      %p64 = scmp.eq.s32.totalorder %s19, 0
      %p65 = por %p63, %p64
      %p66 = scmp.ne.s32.totalorder %s55, %s58
      %p67 = scmp.eq.s32.totalorder %s24, 1
      %p68 = por %p66, %p67
      %p69 = scmp.ne.s32.totalorder %s58, %s59
      %p70 = scmp.eq.s32.totalorder %s24, 0
      %p71 = por %p69, %p70
      %p72 = scmp.ne.s32.totalorder %s58, %s59
      %p73 = scmp.eq.s32.totalorder %s25, 1
      %p74 = por %p72, %p73
      %p76 = scmp.ne.s32.totalorder %s59, %s75
      %p77 = scmp.eq.s32.totalorder %s25, 0
      %p78 = por %p76, %p77
      %s80 = sadd.s32 %s79, 1
      %p83 = scmp.eq.s32.totalorder %s19, 1
      %p84 = scmp.ne.s32.totalorder %s79, %s81
      %p85 = scmp.eq.s32.totalorder %s19, 0
      %p86 = por %p84, %p85
      %p87 = scmp.ne.s32.totalorder %s79, %s81
      %p88 = scmp.eq.s32.totalorder %s24, 1
      %p89 = por %p87, %p88
      %p90 = scmp.ne.s32.totalorder %s81, %s82
      %p91 = scmp.eq.s32.totalorder %s24, 0
      %p92 = por %p90, %p91
      %p93 = scmp.ne.s32.totalorder %s81, %s82
      %p94 = scmp.eq.s32.totalorder %s25, 1
      %p95 = por %p93, %p94
      %p97 = scmp.ne.s32.totalorder %s82, %s96
      %p98 = scmp.eq.s32.totalorder %s25, 0
      %p99 = por %p97, %p98
      %s101 = sadd.s32 %s100, 1
      %p104 = scmp.eq.s32.totalorder %s19, 1
      %p105 = scmp.ne.s32.totalorder %s100, %s102
      %p106 = scmp.eq.s32.totalorder %s19, 0
      %p107 = por %p105, %p106
      %p108 = scmp.ne.s32.totalorder %s100, %s102
      %p109 = scmp.eq.s32.totalorder %s24, 1
      %p110 = por %p108, %p109
      %p111 = scmp.ne.s32.totalorder %s102, %s103
      %p112 = scmp.eq.s32.totalorder %s24, 0
      %p113 = por %p111, %p112
      %p114 = scmp.ne.s32.totalorder %s102, %s103
      %p115 = scmp.eq.s32.totalorder %s25, 1
      %p116 = por %p114, %p115
      %p118 = scmp.ne.s32.totalorder %s103, %s117
      %p119 = scmp.eq.s32.totalorder %s25, 0
      %p120 = por %p118, %p119
      %s121 = ssub.s32 %s19, %s26
      %p122 = scmp.eq.s32.totalorder %s121, 0
      %s124 = sadd.s32 %s123, 1
      %s125 = scalar_select %p122, %s123, %s124
      %p128 = pneg %p122
      %p129 = scmp.eq.s32.totalorder %s19, 1
      %p130 = por %p128, %p129
      %p131 = scmp.ne.s32.totalorder %s123, %s126
      %p132 = scmp.eq.s32.totalorder %s19, 0
      %p133 = por %p131, %p132
      %p134 = scmp.ne.s32.totalorder %s123, %s126
      %p135 = scmp.eq.s32.totalorder %s24, 1
      %p136 = por %p134, %p135
      %p137 = scmp.ne.s32.totalorder %s126, %s127
      %p138 = scmp.eq.s32.totalorder %s24, 0
      %p139 = por %p137, %p138
      %p140 = scmp.ne.s32.totalorder %s126, %s127
      %p141 = scmp.eq.s32.totalorder %s25, 1
      %p142 = por %p140, %p141
      %p144 = scmp.ne.s32.totalorder %s127, %s143
      %p145 = scmp.eq.s32.totalorder %s25, 0
      %p146 = por %p144, %p145
      %p147 = scmp.le.s32.totalorder 1, %s19
      %p148 = scmp.lt.s32.totalorder %s19, 3
      %p149 = pnand %p147, %p148
      %p150 = pneg %p149
      // Predicated region
      $region9: #{tpu_custom_call.1} parent=5 // pred_check
        _
      $region10: #{tpu_custom_call.1} parent=5 // pred_check_branch
        %152 = sbr.rel (%p149) target = $region12
      $region11: #{tpu_custom_call.1} parent=5 // pred_region
        %s153 = ssub.s32 %s19, 1
        // Predicated region
        $region13: #{tpu_custom_call.1} parent=11 // pred_check
          %p154 = pneg %p92
        $region14: #{tpu_custom_call.1} parent=11 // pred_check_branch
          %156 = sbr.rel (%p154) target = $region16
        $region15: #{tpu_custom_call.1} parent=11 // pred_region
          %s158 = ssub.s32 10240, 10240
          %159 = vsyncadd [#allocation6], %s158
          %s160 = sshll.u32 [#allocation7], 4
          %s161 = int_to_ptr.vmem [resolvable:$true] %s160
          %166 = dma.hbm_to_vmem [thread:$0]  %s2, 10240, %s161, [#allocation6], 640, 640, 40
        $region16: #{tpu_custom_call.1} parent=11 // pred_fallthru
          _
        // Predicated region
        $region17: #{tpu_custom_call.1} parent=11 // pred_check
          %p167 = pneg %p113
        $region18: #{tpu_custom_call.1} parent=11 // pred_check_branch
          %169 = sbr.rel (%p167) target = $region20
        $region19: #{tpu_custom_call.1} parent=11 // pred_region
          _
        $region20: #{tpu_custom_call.1} parent=11 // pred_fallthru
          _
      $region12: #{tpu_custom_call.1} parent=5 // pred_fallthru
        _
      %p170 = scmp.lt.s32.totalorder %s19, 2
      // Predicated region
      $region21: #{tpu_custom_call.1} parent=5 // pred_check
        %p171 = pneg %p170
      $region22: #{tpu_custom_call.1} parent=5 // pred_check_branch
        %173 = sbr.rel (%p171) target = $region24
      $region23: #{tpu_custom_call.1} parent=5 // pred_region
        // Predicated region
        $region25: #{tpu_custom_call.1} parent=23 // pred_check
          %p174 = pneg %p39
        $region26: #{tpu_custom_call.1} parent=23 // pred_check_branch
          %176 = sbr.rel (%p174) target = $region28
        $region27: #{tpu_custom_call.1} parent=23 // pred_region
          %s177 = sand.u32 %s29, 1
          %s178 = scalar_lea.sflag [#allocation3], %s177
          %s179 = sand.u32 %s29, 1
          %s180 = smul.addr %s179, 8
          %s181 = scalar_lea.vmem [#allocation2], %s180
          %s183 = ssub.s32 128, 128
          %184 = vsyncadd %s178, %s183
          %s185 = smul.addr %s19, 128
          %s186 = scalar_lea.hbm %s0, %s185
          %s188 = sshll.u32 %s181, 4
          %s189 = int_to_ptr.vmem [resolvable:$true] %s188
          %191 = dma.hbm_to_vmem [thread:$0]  %s186, 128, %s189, %s178
        $region28: #{tpu_custom_call.1} parent=23 // pred_fallthru
          _
        // Predicated region
        $region29: #{tpu_custom_call.1} parent=23 // pred_check
          %p192 = pneg %p65
        $region30: #{tpu_custom_call.1} parent=23 // pred_check_branch
          %194 = sbr.rel (%p192) target = $region32
        $region31: #{tpu_custom_call.1} parent=23 // pred_region
          %s195 = sand.u32 %s19, 1
          %s196 = scalar_lea.sflag [#allocation6], %s195
          %s197 = sand.u32 %s55, 1
          %s198 = smul.addr %s197, 8
          %s199 = scalar_lea.vmem [#allocation5], %s198
          %s201 = ssub.s32 128, 128
          %202 = vsyncadd %s196, %s201
          %s203 = smul.addr %s19, 128
          %s204 = scalar_lea.hbm %s1, %s203
          %s206 = sshll.u32 %s199, 4
          %s207 = int_to_ptr.vmem [resolvable:$true] %s206
          %209 = dma.hbm_to_vmem [thread:$0]  %s204, 128, %s207, %s196
        $region32: #{tpu_custom_call.1} parent=23 // pred_fallthru
          _
      $region24: #{tpu_custom_call.1} parent=5 // pred_fallthru
        _
      %p210 = scmp.le.s32.totalorder 1, %s19
      %p211 = scmp.lt.s32.totalorder %s19, 3
      %p212 = pnand %p210, %p211
      %p213 = pneg %p212
      // Predicated region
      $region33: #{tpu_custom_call.1} parent=5 // pred_check
        _
      $region34: #{tpu_custom_call.1} parent=5 // pred_check_branch
        %215 = sbr.rel (%p212) target = $region36
      $region35: #{tpu_custom_call.1} parent=5 // pred_region
        %s216 = ssub.s32 %s19, 1
        %s217 = sand.u32 %s32, 1
        %s218 = scalar_lea.sflag [#allocation3], %s217
        %s219 = sand.u32 %s32, 1
        %s220 = smul.addr %s219, 8
        %s221 = scalar_lea.vmem [#allocation2], %s220
        // Predicated region
        $region37: #{tpu_custom_call.1} parent=35 // pred_check
          %p222 = pneg %p45
        $region38: #{tpu_custom_call.1} parent=35 // pred_check_branch
          %224 = sbr.rel (%p222) target = $region40
        $region39: #{tpu_custom_call.1} parent=35 // pred_region
          %225 = dma.done %s218, 128
        $region40: #{tpu_custom_call.1} parent=35 // pred_fallthru
          _
        %s226 = sand.u32 %s24, 1
        %s227 = scalar_lea.sflag [#allocation6], %s226
        %s228 = sand.u32 %s58, 1
        %s229 = smul.addr %s228, 8
        %s230 = scalar_lea.vmem [#allocation5], %s229
        // Predicated region
        $region41: #{tpu_custom_call.1} parent=35 // pred_check
          %p231 = pneg %p71
        $region42: #{tpu_custom_call.1} parent=35 // pred_check_branch
          %233 = sbr.rel (%p231) target = $region44
        $region43: #{tpu_custom_call.1} parent=35 // pred_region
          %234 = dma.done %s227, 128
        $region44: #{tpu_custom_call.1} parent=35 // pred_fallthru
          _
        // Predicated region
        $region45: #{tpu_custom_call.1} parent=35 // pred_check
          %p235 = pneg %p92
        $region46: #{tpu_custom_call.1} parent=35 // pred_check_branch
          %237 = sbr.rel (%p235) target = $region48
        $region47: #{tpu_custom_call.1} parent=35 // pred_region
          %238 = dma.done [#allocation6], 10240
        $region48: #{tpu_custom_call.1} parent=35 // pred_fallthru
          _
        %s239 = sand.u32 %s32, 1
        %s240 = scalar_lea.sflag [#allocation3], %s239
        %s241 = sand.u32 %s32, 1
        %s242 = smul.addr %s241, 8
        %s243 = scalar_lea.vmem [#allocation2], %s242
        %p244 = pneg %p45
        %p245 = pneg %p42
        %s246 = sand.u32 %s24, 1
        %s247 = scalar_lea.sflag [#allocation6], %s246
        %s248 = sand.u32 %s58, 1
        %s249 = smul.addr %s248, 8
        %s250 = scalar_lea.vmem [#allocation5], %s249
        %p251 = pneg %p71
        %p252 = pneg %p68
        %p253 = pneg %p92
        %p254 = pneg %p89
        %p255 = pneg %p113
        %p256 = pneg %p110
        %p257 = pneg %p139
        %p258 = pneg %p136
        %s259 = sand.u32 %s126, 1
        %s260 = scalar_lea.sflag [#allocation4], %s259
        %s261 = sand.u32 %s126, 1
        %s262 = smul.addr %s261, 8
        %s263 = scalar_lea.vmem [#allocation8], %s262
        %v264 = vld [vmem:[%s221] sm:$0xff]
        %v265 = vld [vmem:[%s3] sm:$0x1]
        %v266 = vld [vmem:[%s3 + $0x1] sm:$0x1]
        %v267 = vld [vmem:[%s3 + $0x2] sm:$0x1]
        %v268 = vld [vmem:[%s3 + $0x3] sm:$0x1]
        %v269 = vld [vmem:[%s3 + $0x4] sm:$0x1]
        %v270 = vld [vmem:[%s3 + $0x5] sm:$0x1]
        %v271 = vld [vmem:[#allocation7] sm:$0xff]
        %v272 = vld [vmem:[#allocation7 + $0x8] sm:$0xff]
        %v273 = vld [vmem:[#allocation7 + $0x28] sm:$0xff]
        %v274 = vld [vmem:[#allocation7 + $0x30] sm:$0xff]
        %v275 = vld [vmem:[#allocation7 + $0x50] sm:$0xff]
        %v276 = vld [vmem:[#allocation7 + $0x58] sm:$0xff]
        %v277 = vld [vmem:[#allocation7 + $0x78] sm:$0xff]
        %v278 = vld [vmem:[#allocation7 + $0x80] sm:$0xff]
        %v279 = vld [vmem:[#allocation7 + $0xa0] sm:$0xff]
        %v280 = vld [vmem:[#allocation7 + $0xa8] sm:$0xff]
        %v281 = vld [vmem:[#allocation7 + $0xc8] sm:$0xff]
        %v282 = vld [vmem:[#allocation7 + $0xd0] sm:$0xff]
        %v283 = vld [vmem:[#allocation7 + $0xf0] sm:$0xff]
        %v284 = vld [vmem:[#allocation7 + $0xf8] sm:$0xff]
        %v285 = vld [vmem:[#allocation7 + $0x118] sm:$0xff]
        %v286 = vld [vmem:[#allocation7 + $0x120] sm:$0xff]
        %v287 = vld [vmem:[#allocation7 + $0x140] sm:$0xff]
        %v288 = vld [vmem:[#allocation7 + $0x148] sm:$0xff]
        %v289 = vld [vmem:[#allocation7 + $0x168] sm:$0xff]
        %v290 = vld [vmem:[#allocation7 + $0x170] sm:$0xff]
        %v291 = vld [vmem:[#allocation7 + $0x190] sm:$0xff]
        %v292 = vld [vmem:[#allocation7 + $0x198] sm:$0xff]
        %v293 = vld [vmem:[#allocation7 + $0x1b8] sm:$0xff]
        %v294 = vld [vmem:[#allocation7 + $0x1c0] sm:$0xff]
        %v295 = vld [vmem:[#allocation7 + $0x1e0] sm:$0xff]
        %v296 = vld [vmem:[#allocation7 + $0x1e8] sm:$0xff]
        %v297 = vld [vmem:[#allocation7 + $0x208] sm:$0xff]
        %v298 = vld [vmem:[#allocation7 + $0x210] sm:$0xff]
        %v299 = vld [vmem:[#allocation7 + $0x230] sm:$0xff]
        %v300 = vld [vmem:[#allocation7 + $0x238] sm:$0xff]
        %v301 = vld [vmem:[#allocation7 + $0x258] sm:$0xff]
        %v302 = vld [vmem:[#allocation7 + $0x260] sm:$0xff]
        %303 = vmatprep.subr.mxu0 %v272
        %304 = vmatpush1.msra.mxu0 %v271
        %305 = vmatprep.subr.mxu0 %v274
        %306 = vmatpush1.msra.mxu0 %v273
        %307 = vmatprep.subr.mxu0 %v276
        %308 = vmatpush1.msra.mxu0 %v275
        %309 = vmatprep.subr.mxu0 %v278
        %310 = vmatpush1.msra.mxu0 %v277
        %311 = vmatprep.subr.mxu0 %v280
        %312 = vmatpush1.msra.mxu0 %v279
        %313 = vmatprep.subr.mxu0 %v282
        %314 = vmatpush1.msra.mxu0 %v281
        %315 = vmatprep.subr.mxu0 %v284
        %316 = vmatpush1.msra.mxu0 %v283
        %317 = vmatprep.subr.mxu0 %v286
        %318 = vmatpush1.msra.mxu0 %v285
        %319 = vmatprep.subr.mxu0 %v288
        %320 = vmatpush1.msra.mxu0 %v287
        %321 = vmatprep.subr.mxu0 %v290
        %322 = vmatpush1.msra.mxu0 %v289
        %323 = vmatprep.subr.mxu0 %v292
        %324 = vmatpush1.msra.mxu0 %v291
        %325 = vmatprep.subr.mxu0 %v294
        %326 = vmatpush1.msra.mxu0 %v293
        %327 = vmatprep.subr.mxu0 %v296
        %328 = vmatpush1.msra.mxu0 %v295
        %329 = vmatprep.subr.mxu0 %v298
        %330 = vmatpush1.msra.mxu0 %v297
        %331 = vmatprep.subr.mxu0 %v300
        %332 = vmatpush1.msra.mxu0 %v299
        %333 = vmatprep.subr.mxu0 %v302
        %334 = vmatpush1.msra.mxu0 %v301
        %335 = vmatprep.subr.mxu0 0.0
        %336 = vmatpush1.msra.mxu0 0.0
        %337 = vmatprep.subr.mxu0 0.0
        %338 = vmatpush1.msra.mxu0 0.0
        %339 = vmatprep.subr.mxu0 0.0
        %340 = vmatpush1.msra.mxu0 0.0
        %341 = vmatprep.subr.mxu0 0.0
        %342 = vmatpush1.msra.mxu0 0.0
        %343 = vmatprep.subr.mxu0 0.0
        %344 = vmatpush1.msra.mxu0 0.0
        %345 = vmatprep.subr.mxu0 0.0
        %346 = vmatpush1.msra.mxu0 0.0
        %347 = vmatprep.subr.mxu0 0.0
        %348 = vmatpush1.msra.mxu0 0.0
        %349 = vmatprep.subr.mxu0 0.0
        %350 = vmatpush1.msra.mxu0 0.0
        %351 = vmatprep.subr.mxu0 0.0
        %352 = vmatpush1.msra.mxu0 0.0
        %353 = vmatprep.subr.mxu0 0.0
        %354 = vmatpush1.msra.mxu0 0.0
        %355 = vmatprep.subr.mxu0 0.0
        %356 = vmatpush1.msra.mxu0 0.0
        %357 = vmatprep.subr.mxu0 0.0
        %358 = vmatpush1.msra.mxu0 0.0
        %359 = vmatprep.subr.mxu0 0.0
        %360 = vmatpush1.msra.mxu0 0.0
        %361 = vmatprep.subr.mxu0 0.0
        %362 = vmatpush1.msra.mxu0 0.0
        %363 = vmatprep.subr.mxu0 0.0
        %364 = vmatpush1.msra.mxu0 0.0
        %365 = vmatprep.subr.mxu0 0.0
        %366 = vmatpush1.msra.mxu0 0.0
        %367 = vmatprep.mubr.f32.mxu0 0.0
        %368 = vmatmul.mubr.f32.gmra.mrb[0].mxu0 %v264
        %v369 = vpop.f32.mrb[0].mxu0
        %v370 = vadd.f32 0.0, %v369
        %v371 = vpop.f32.mrb[0].mxu0
        %v372 = vadd.f32 0.0, %v371
        %373 = vdwg.mxu0
        %v374 = vlaneseq
        %v375 = vshrl.u32 %v374, 7
        %v376 = vsub.s32 0, %v375
        %v377 = vrot.slane %v265, %v376
        %v378 = vadd.f32 %v370, %v377
        %v379 = vtanh.pop %v378
        %v380 = vld [vmem:[#allocation7 + $0x10] sm:$0xff]
        %v381 = vld [vmem:[#allocation7 + $0x38] sm:$0xff]
        %v382 = vld [vmem:[#allocation7 + $0x60] sm:$0xff]
        %v383 = vld [vmem:[#allocation7 + $0x88] sm:$0xff]
        %v384 = vld [vmem:[#allocation7 + $0xb0] sm:$0xff]
        %v385 = vld [vmem:[#allocation7 + $0xd8] sm:$0xff]
        %v386 = vld [vmem:[#allocation7 + $0x100] sm:$0xff]
        %v387 = vld [vmem:[#allocation7 + $0x128] sm:$0xff]
        %v388 = vld [vmem:[#allocation7 + $0x150] sm:$0xff]
        %v389 = vld [vmem:[#allocation7 + $0x178] sm:$0xff]
        %v390 = vld [vmem:[#allocation7 + $0x1a0] sm:$0xff]
        %v391 = vld [vmem:[#allocation7 + $0x1c8] sm:$0xff]
        %v392 = vld [vmem:[#allocation7 + $0x1f0] sm:$0xff]
        %v393 = vld [vmem:[#allocation7 + $0x218] sm:$0xff]
        %v394 = vld [vmem:[#allocation7 + $0x240] sm:$0xff]
        %v395 = vld [vmem:[#allocation7 + $0x268] sm:$0xff]
        %v396 = vlaneseq
        %v397 = vshrl.u32 %v396, 7
        %v398 = vsub.s32 0, %v397
        %v399 = vrot.slane %v266, %v398
        %400 = vmatprep.subr.mxu0 0.0
        %401 = vmatpush1.msra.mxu0 %v380
        %402 = vmatprep.subr.mxu0 0.0
        %403 = vmatpush1.msra.mxu0 %v381
        %404 = vmatprep.subr.mxu0 0.0
        %405 = vmatpush1.msra.mxu0 %v382
        %406 = vmatprep.subr.mxu0 0.0
        %407 = vmatpush1.msra.mxu0 %v383
        %408 = vmatprep.subr.mxu0 0.0
        %409 = vmatpush1.msra.mxu0 %v384
        %410 = vmatprep.subr.mxu0 0.0
        %411 = vmatpush1.msra.mxu0 %v385
        %412 = vmatprep.subr.mxu0 0.0
        %413 = vmatpush1.msra.mxu0 %v386
        %414 = vmatprep.subr.mxu0 0.0
        %415 = vmatpush1.msra.mxu0 %v387
        %416 = vmatprep.subr.mxu0 0.0
        %417 = vmatpush1.msra.mxu0 %v388
        %418 = vmatprep.subr.mxu0 0.0
        %419 = vmatpush1.msra.mxu0 %v389
        %420 = vmatprep.subr.mxu0 0.0
        %421 = vmatpush1.msra.mxu0 %v390
        %422 = vmatprep.subr.mxu0 0.0
        %423 = vmatpush1.msra.mxu0 %v391
        %424 = vmatprep.subr.mxu0 0.0
        %425 = vmatpush1.msra.mxu0 %v392
        %426 = vmatprep.subr.mxu0 0.0
        %427 = vmatpush1.msra.mxu0 %v393
        %428 = vmatprep.subr.mxu0 0.0
        %429 = vmatpush1.msra.mxu0 %v394
        %430 = vmatprep.subr.mxu0 0.0
        %431 = vmatpush1.msra.mxu0 %v395
        %432 = vmatprep.subr.mxu0 0.0
        %433 = vmatpush1.msra.mxu0 0.0
        %434 = vmatprep.subr.mxu0 0.0
        %435 = vmatpush1.msra.mxu0 0.0
        %436 = vmatprep.subr.mxu0 0.0
        %437 = vmatpush1.msra.mxu0 0.0
        %438 = vmatprep.subr.mxu0 0.0
        %439 = vmatpush1.msra.mxu0 0.0
        %440 = vmatprep.subr.mxu0 0.0
        %441 = vmatpush1.msra.mxu0 0.0
        %442 = vmatprep.subr.mxu0 0.0
        %443 = vmatpush1.msra.mxu0 0.0
        %444 = vmatprep.subr.mxu0 0.0
        %445 = vmatpush1.msra.mxu0 0.0
        %446 = vmatprep.subr.mxu0 0.0
        %447 = vmatpush1.msra.mxu0 0.0
        %448 = vmatprep.subr.mxu0 0.0
        %449 = vmatpush1.msra.mxu0 0.0
        %450 = vmatprep.subr.mxu0 0.0
        %451 = vmatpush1.msra.mxu0 0.0
        %452 = vmatprep.subr.mxu0 0.0
        %453 = vmatpush1.msra.mxu0 0.0
        %454 = vmatprep.subr.mxu0 0.0
        %455 = vmatpush1.msra.mxu0 0.0
        %456 = vmatprep.subr.mxu0 0.0
        %457 = vmatpush1.msra.mxu0 0.0
        %458 = vmatprep.subr.mxu0 0.0
        %459 = vmatpush1.msra.mxu0 0.0
        %460 = vmatprep.subr.mxu0 0.0
        %461 = vmatpush1.msra.mxu0 0.0
        %462 = vmatprep.subr.mxu0 0.0
        %463 = vmatpush1.msra.mxu0 0.0
        %464 = vmatprep.mubr.f32.mxu0 0.0
        %465 = vmatmul.mubr.f32.gmra.mrb[0].mxu0 %v379
        %v466 = vpop.f32.mrb[0].mxu0
        %v467 = vadd.f32 %v399, %v466
        %v468 = vpop.f32.mrb[0].mxu0
        %469 = vdwg.mxu0
        %v470 = vld [vmem:[%s230] sm:$0xff]
        %v471 = vmul.f32 %v470, 0.01
        %v472 = vadd.f32 %v467, %v471
        %v473 = vld [vmem:[#allocation7 + $0x18] sm:$0xff]
        %v474 = vld [vmem:[#allocation7 + $0x40] sm:$0xff]
        %v475 = vld [vmem:[#allocation7 + $0x68] sm:$0xff]
        %v476 = vld [vmem:[#allocation7 + $0x90] sm:$0xff]
        %v477 = vld [vmem:[#allocation7 + $0xb8] sm:$0xff]
        %v478 = vld [vmem:[#allocation7 + $0xe0] sm:$0xff]
        %v479 = vld [vmem:[#allocation7 + $0x108] sm:$0xff]
        %v480 = vld [vmem:[#allocation7 + $0x130] sm:$0xff]
        %v481 = vld [vmem:[#allocation7 + $0x158] sm:$0xff]
        %v482 = vld [vmem:[#allocation7 + $0x180] sm:$0xff]
        %v483 = vld [vmem:[#allocation7 + $0x1a8] sm:$0xff]
        %v484 = vld [vmem:[#allocation7 + $0x1d0] sm:$0xff]
        %v485 = vld [vmem:[#allocation7 + $0x1f8] sm:$0xff]
        %v486 = vld [vmem:[#allocation7 + $0x220] sm:$0xff]
        %v487 = vld [vmem:[#allocation7 + $0x248] sm:$0xff]
        %v488 = vld [vmem:[#allocation7 + $0x270] sm:$0xff]
        %489 = vmatprep.subr.mxu0 0.0
        %490 = vmatpush1.msra.mxu0 %v473
        %491 = vmatprep.subr.mxu0 0.0
        %492 = vmatpush1.msra.mxu0 %v474
        %493 = vmatprep.subr.mxu0 0.0
        %494 = vmatpush1.msra.mxu0 %v475
        %495 = vmatprep.subr.mxu0 0.0
        %496 = vmatpush1.msra.mxu0 %v476
        %497 = vmatprep.subr.mxu0 0.0
        %498 = vmatpush1.msra.mxu0 %v477
        %499 = vmatprep.subr.mxu0 0.0
        %500 = vmatpush1.msra.mxu0 %v478
        %501 = vmatprep.subr.mxu0 0.0
        %502 = vmatpush1.msra.mxu0 %v479
        %503 = vmatprep.subr.mxu0 0.0
        %504 = vmatpush1.msra.mxu0 %v480
        %505 = vmatprep.subr.mxu0 0.0
        %506 = vmatpush1.msra.mxu0 %v481
        %507 = vmatprep.subr.mxu0 0.0
        %508 = vmatpush1.msra.mxu0 %v482
        %509 = vmatprep.subr.mxu0 0.0
        %510 = vmatpush1.msra.mxu0 %v483
        %511 = vmatprep.subr.mxu0 0.0
        %512 = vmatpush1.msra.mxu0 %v484
        %513 = vmatprep.subr.mxu0 0.0
        %514 = vmatpush1.msra.mxu0 %v485
        %515 = vmatprep.subr.mxu0 0.0
        %516 = vmatpush1.msra.mxu0 %v486
        %517 = vmatprep.subr.mxu0 0.0
        %518 = vmatpush1.msra.mxu0 %v487
        %519 = vmatprep.subr.mxu0 0.0
        %520 = vmatpush1.msra.mxu0 %v488
        %521 = vmatprep.subr.mxu0 0.0
        %522 = vmatpush1.msra.mxu0 0.0
        %523 = vmatprep.subr.mxu0 0.0
        %524 = vmatpush1.msra.mxu0 0.0
        %525 = vmatprep.subr.mxu0 0.0
        %526 = vmatpush1.msra.mxu0 0.0
        %527 = vmatprep.subr.mxu0 0.0
        %528 = vmatpush1.msra.mxu0 0.0
        %529 = vmatprep.subr.mxu0 0.0
        %530 = vmatpush1.msra.mxu0 0.0
        %531 = vmatprep.subr.mxu0 0.0
        %532 = vmatpush1.msra.mxu0 0.0
        %533 = vmatprep.subr.mxu0 0.0
        %534 = vmatpush1.msra.mxu0 0.0
        %535 = vmatprep.subr.mxu0 0.0
        %536 = vmatpush1.msra.mxu0 0.0
        %537 = vmatprep.subr.mxu0 0.0
        %538 = vmatpush1.msra.mxu0 0.0
        %539 = vmatprep.subr.mxu0 0.0
        %540 = vmatpush1.msra.mxu0 0.0
        %541 = vmatprep.subr.mxu0 0.0
        %542 = vmatpush1.msra.mxu0 0.0
        %543 = vmatprep.subr.mxu0 0.0
        %544 = vmatpush1.msra.mxu0 0.0
        %545 = vmatprep.subr.mxu0 0.0
        %546 = vmatpush1.msra.mxu0 0.0
        %547 = vmatprep.subr.mxu0 0.0
        %548 = vmatpush1.msra.mxu0 0.0
        %549 = vmatprep.subr.mxu0 0.0
        %550 = vmatpush1.msra.mxu0 0.0
        %551 = vmatprep.subr.mxu0 0.0
        %552 = vmatpush1.msra.mxu0 0.0
        %553 = vmatprep.mubr.f32.mxu0 0.0
        %554 = vmatmul.mubr.f32.gmra.mrb[0].mxu0 %v472
        %v555 = vpop.f32.mrb[0].mxu0
        %v556 = vadd.f32 %v372, %v555
        %v557 = vpop.f32.mrb[0].mxu0
        %558 = vdwg.mxu0
        %v559 = vlaneseq
        %v560 = vshrl.u32 %v559, 7
        %v561 = vsub.s32 0, %v560
        %v562 = vrot.slane %v267, %v561
        %v563 = vadd.f32 %v556, %v562
        %v564 = vtanh.pop %v563
        %v565 = vld [vmem:[#allocation7 + $0x20] sm:$0xff]
        %v566 = vld [vmem:[#allocation7 + $0x48] sm:$0xff]
        %v567 = vld [vmem:[#allocation7 + $0x70] sm:$0xff]
        %v568 = vld [vmem:[#allocation7 + $0x98] sm:$0xff]
        %v569 = vld [vmem:[#allocation7 + $0xc0] sm:$0xff]
        %v570 = vld [vmem:[#allocation7 + $0xe8] sm:$0xff]
        %v571 = vld [vmem:[#allocation7 + $0x110] sm:$0xff]
        %v572 = vld [vmem:[#allocation7 + $0x138] sm:$0xff]
        %v573 = vld [vmem:[#allocation7 + $0x160] sm:$0xff]
        %v574 = vld [vmem:[#allocation7 + $0x188] sm:$0xff]
        %v575 = vld [vmem:[#allocation7 + $0x1b0] sm:$0xff]
        %v576 = vld [vmem:[#allocation7 + $0x1d8] sm:$0xff]
        %v577 = vld [vmem:[#allocation7 + $0x200] sm:$0xff]
        %v578 = vld [vmem:[#allocation7 + $0x228] sm:$0xff]
        %v579 = vld [vmem:[#allocation7 + $0x250] sm:$0xff]
        %v580 = vld [vmem:[#allocation7 + $0x278] sm:$0xff]
        %v581 = vlaneseq
        %v582 = vshrl.u32 %v581, 7
        %v583 = vsub.s32 0, %v582
        %v584 = vrot.slane %v268, %v583
        %585 = vmatprep.subr.mxu0 0.0
        %586 = vmatpush1.msra.mxu0 %v565
        %587 = vmatprep.subr.mxu0 0.0
        %588 = vmatpush1.msra.mxu0 %v566
        %589 = vmatprep.subr.mxu0 0.0
        %590 = vmatpush1.msra.mxu0 %v567
        %591 = vmatprep.subr.mxu0 0.0
        %592 = vmatpush1.msra.mxu0 %v568
        %593 = vmatprep.subr.mxu0 0.0
        %594 = vmatpush1.msra.mxu0 %v569
        %595 = vmatprep.subr.mxu0 0.0
        %596 = vmatpush1.msra.mxu0 %v570
        %597 = vmatprep.subr.mxu0 0.0
        %598 = vmatpush1.msra.mxu0 %v571
        %599 = vmatprep.subr.mxu0 0.0
        %600 = vmatpush1.msra.mxu0 %v572
        %601 = vmatprep.subr.mxu0 0.0
        %602 = vmatpush1.msra.mxu0 %v573
        %603 = vmatprep.subr.mxu0 0.0
        %604 = vmatpush1.msra.mxu0 %v574
        %605 = vmatprep.subr.mxu0 0.0
        %606 = vmatpush1.msra.mxu0 %v575
        %607 = vmatprep.subr.mxu0 0.0
        %608 = vmatpush1.msra.mxu0 %v576
        %609 = vmatprep.subr.mxu0 0.0
        %610 = vmatpush1.msra.mxu0 %v577
        %611 = vmatprep.subr.mxu0 0.0
        %612 = vmatpush1.msra.mxu0 %v578
        %613 = vmatprep.subr.mxu0 0.0
        %614 = vmatpush1.msra.mxu0 %v579
        %615 = vmatprep.subr.mxu0 0.0
        %616 = vmatpush1.msra.mxu0 %v580
        %617 = vmatprep.subr.mxu0 0.0
        %618 = vmatpush1.msra.mxu0 0.0
        %619 = vmatprep.subr.mxu0 0.0
        %620 = vmatpush1.msra.mxu0 0.0
        %621 = vmatprep.subr.mxu0 0.0
        %622 = vmatpush1.msra.mxu0 0.0
        %623 = vmatprep.subr.mxu0 0.0
        %624 = vmatpush1.msra.mxu0 0.0
        %625 = vmatprep.subr.mxu0 0.0
        %626 = vmatpush1.msra.mxu0 0.0
        %627 = vmatprep.subr.mxu0 0.0
        %628 = vmatpush1.msra.mxu0 0.0
        %629 = vmatprep.subr.mxu0 0.0
        %630 = vmatpush1.msra.mxu0 0.0
        %631 = vmatprep.subr.mxu0 0.0
        %632 = vmatpush1.msra.mxu0 0.0
        %633 = vmatprep.subr.mxu0 0.0
        %634 = vmatpush1.msra.mxu0 0.0
        %635 = vmatprep.subr.mxu0 0.0
        %636 = vmatpush1.msra.mxu0 0.0
        %637 = vmatprep.subr.mxu0 0.0
        %638 = vmatpush1.msra.mxu0 0.0
        %639 = vmatprep.subr.mxu0 0.0
        %640 = vmatpush1.msra.mxu0 0.0
        %641 = vmatprep.subr.mxu0 0.0
        %642 = vmatpush1.msra.mxu0 0.0
        %643 = vmatprep.subr.mxu0 0.0
        %644 = vmatpush1.msra.mxu0 0.0
        %645 = vmatprep.subr.mxu0 0.0
        %646 = vmatpush1.msra.mxu0 0.0
        %647 = vmatprep.subr.mxu0 0.0
        %648 = vmatpush1.msra.mxu0 0.0
        %649 = vmatprep.mubr.f32.mxu0 0.0
        %650 = vmatmul.mubr.f32.gmra.mrb[0].mxu0 %v564
        %v651 = vpop.f32.mrb[0].mxu0
        %v652 = vadd.f32 %v584, %v651
        %v653 = vpop.f32.mrb[0].mxu0
        %654 = vdwg.mxu0
        %v655 = vsub.f32 %v652, %v264
        %v656 = vmul.f32 %v655, %v655
        %v657 = vlaneseq
        %v658 = vshrl.u32 %v657, 7
        %v659 = vsub.s32 0, %v658
        %v660 = vrot.slane %v269, %v659
        %v661 = vmul.f32 %v656, %v660
        %662 = vadd.xlane.f32.xlu0 %v661
        %v663 = vpop.xlane.xlu0 %662
        %v664 = vmul.f32 %v663, -5000.0
        %v665 = vlaneseq
        %v666 = vshrl.u32 %v665, 7
        %v667 = vsub.s32 0, %v666
        %v668 = vrot.slane %v270, %v667
        %v669 = vmul.f32 %v664, %v668
        %v670 = vadd.f32 %v472, %v669
        %671 = vst [vmem:[%s263] sm:$0xff] %v670
        %s672 = sand.u32 %s126, 1
        %s673 = scalar_lea.sflag [#allocation4], %s672
        %s674 = sand.u32 %s126, 1
        %s675 = smul.addr %s674, 8
        %s676 = scalar_lea.vmem [#allocation8], %s675
        // Predicated region
        $region49: #{tpu_custom_call.1} parent=35 // pred_check
          %p677 = pneg %p136
        $region50: #{tpu_custom_call.1} parent=35 // pred_check_branch
          %679 = sbr.rel (%p677) target = $region52
        $region51: #{tpu_custom_call.1} parent=35 // pred_region
          %s681 = ssub.s32 128, 128
          %682 = vsyncadd %s673, %s681
          %s683 = smul.addr %s24, 128
          %s684 = scalar_lea.hbm %s4, %s683
          %s686 = sshll.u32 %s676, 4
          %s687 = int_to_ptr.vmem [resolvable:$true] %s686
          %689 = dma.vmem_to_hbm [thread:$0]  %s687, 128, %s684, %s673
        $region52: #{tpu_custom_call.1} parent=35 // pred_fallthru
          _
      $region36: #{tpu_custom_call.1} parent=5 // pred_fallthru
        _
      %p690 = scmp.le.s32.totalorder 2, %s19
      // Predicated region
      $region53: #{tpu_custom_call.1} parent=5 // pred_check
        %p691 = pneg %p690
      $region54: #{tpu_custom_call.1} parent=5 // pred_check_branch
        %693 = sbr.rel (%p691) target = $region56
      $region55: #{tpu_custom_call.1} parent=5 // pred_region
        %s694 = ssub.s32 %s19, 2
        // Predicated region
        $region57: #{tpu_custom_call.1} parent=55 // pred_check
          %p695 = pneg %p142
        $region58: #{tpu_custom_call.1} parent=55 // pred_check_branch
          %697 = sbr.rel (%p695) target = $region60
        $region59: #{tpu_custom_call.1} parent=55 // pred_region
          %s698 = sand.u32 %s127, 1
          %s699 = scalar_lea.sflag [#allocation4], %s698
          %s700 = sand.u32 %s127, 1
          %s701 = smul.addr %s700, 8
          %s702 = scalar_lea.vmem [#allocation8], %s701
          %703 = dma.done %s699, 128
        $region60: #{tpu_custom_call.1} parent=55 // pred_fallthru
          _
      $region56: #{tpu_custom_call.1} parent=5 // pred_fallthru
        _
    $region6: #{tpu_custom_call.1} parent=1 // loop_footer
      %s23 = sadd.s32 1, %s19
    $region7: #{tpu_custom_call.1} parent=1 // loop_footer_branch
      %18 = sbr.rel target = $region3
    $region8: #{tpu_custom_call.1} parent=1 // loop_exit
      _
    %704 = vsyncpa [#allocation3], 1
    %s705 = scalar_lea.sflag [#allocation3], 1
    %706 = vsyncpa %s705, 1
    %707 = vsyncpa [#allocation6], 1
    %s708 = scalar_lea.sflag [#allocation6], 1
    %709 = vsyncpa %s708, 1
    %710 = vsyncpa [#allocation4], 1
    %s711 = scalar_lea.sflag [#allocation4], 1
    %712 = vsyncpa %s711, 1

</llo_original>
